<compile_context>
chip_gen: v7x
topology: tpu7x:2x2x1
jax: 0.10.0
libtpu: 0.0.40
codegen_flags: <defaults>
</compile_context>

<pallas_src>
import jax
import jax.numpy as jnp
from jax.experimental import pallas as pl
from jax.experimental.pallas import tpu as pltpu


def _group_linear_kernel(tg_ref, tv_ref, x_ref, w_ref, o_ref):
    """One grid step: (TM, I) tile of one group times that group's (I, TN) weight tile."""
    m = pl.program_id(0)

    @pl.when(tv_ref[m] == 1)
    def _():
        # Single lane-dense MXU matmul; each output block is written exactly once,
        # so no scratch accumulator / per-step copy is needed.
        o_ref[...] = jnp.dot(
            x_ref[...], w_ref[...], preferred_element_type=jnp.float32
        ).astype(o_ref.dtype)

    @pl.when(tv_ref[m] == 0)
    def _():
        # Padding tile beyond the last routed row: skip the matmul, emit zeros
        # (these rows are dropped by the wrapper anyway).
        o_ref[...] = jnp.zeros_like(o_ref)


def _round_up(v, m):
    return ((v + m - 1) // m) * m


def group_linear(x, group, weight, *, tm=None, tn=None):
    """x: (N, S, I), group: (N, S) int in [0, G), weight: (G, O, I) -> (N, S, O)."""
    N, S, I = x.shape
    G, O, _ = weight.shape
    M = N * S

    # ---- tile sizes (lane-dense output, (8,128)-rule friendly) ----
    if tn is None:
        tn = next((t for t in (512, 256, 128) if O % t == 0), O)
    if tm is None:
        tm = min(512, _round_up(M, 8))
    tm, tn = int(tm), int(tn)
    assert tm % 8 == 0, "tm must be a multiple of 8"
    assert O % tn == 0, "O must be divisible by tn"

    in_elt = jnp.dtype(x.dtype).itemsize
    w_elt = jnp.dtype(weight.dtype).itemsize

    # ---- VMEM-aware tiling: derive budget from the chip, auto-shrink tm to fit ----
    try:
        vmem_cap = int(getattr(pltpu.get_tpu_info(), "vmem_capacity_bytes", 64 << 20))
    except Exception:
        vmem_cap = 64 << 20
    budget = int(vmem_cap * 0.75)

    def vmem_need(tm_, tn_):
        # double-buffered x, weight and output blocks (no scratch accumulators)
        return 2 * (tm_ * I * in_elt + I * tn_ * w_elt + tm_ * tn_ * in_elt)

    while vmem_need(tm, tn) > budget and tm > 8:
        tm = max(8, _round_up(tm // 2, 8))
    # TODO(synk): for extremely large I where even tm=8 overflows VMEM, add an inner
    # "arbitrary" K grid axis (K-tiling over I) instead of shrinking tm further.

    num_tiles = (M + tm - 1) // tm + G - 1      # static bound on per-group-padded tiles
    m_pad = num_tiles * tm
    num_o_tiles = O // tn

    # ---- megablocks routing metadata (all static shapes) ----
    x2 = x.reshape(M, I)
    g1 = group.reshape(M).astype(jnp.int32)

    sizes = jnp.bincount(g1, length=G).astype(jnp.int32)        # rows per group
    g_end = jnp.cumsum(sizes)
    g_start = g_end - sizes
    padded_sizes = ((sizes + tm - 1) // tm) * tm                 # per-group rows, padded to tm
    p_end = jnp.cumsum(padded_sizes)
    p_start = p_end - padded_sizes

    order = jnp.argsort(g1)                                      # tokens sorted by group
    g_sorted = g1[order]
    pos = jnp.arange(M, dtype=jnp.int32)
    dest = (p_start[g_sorted] + (pos - g_start[g_sorted])).astype(jnp.int32)

    # Scatter tokens into their padded, group-contiguous rows (padding rows stay zero).
    x_padded = jnp.zeros((m_pad, I), x.dtype).at[dest].set(x2[order])
    # Per-original-token row in the padded layout (scatter-built inverse perm, no 2nd argsort).
    token_dest = jnp.zeros((M,), jnp.int32).at[order].set(dest)

    # Per-tile expert id + validity: with per-group padding every tile has exactly one group.
    tile_row = jnp.arange(num_tiles, dtype=jnp.int32) * tm
    total_rows = p_end[-1]
    tile_valid = (tile_row < total_rows).astype(jnp.int32)
    tile_group = jnp.minimum(
        jnp.searchsorted(p_end, tile_row, side="right").astype(jnp.int32), G - 1)

    # Lane-dense weight layout (G, I, O): native (TM,I) x (I,TN) MXU contraction, no
    # transposed-RHS contraction that could pull in an XLU transpose.
    w_t = jnp.swapaxes(weight, 1, 2)
    # TODO(synk): optionally cast x_padded / w_t to bf16 here for MXU peak (changes
    # numerics vs the f32 torch reference, so left off by default).

    # ---- pallas_call: grid (m tiles, o tiles); O innermost so x stays VMEM-resident ----
    x_spec = pl.BlockSpec((tm, I), lambda m, n, tg, tv: (m, 0))
    w_spec = pl.BlockSpec((None, I, tn), lambda m, n, tg, tv: (tg[m], 0, n))
    o_spec = pl.BlockSpec((tm, tn), lambda m, n, tg, tv: (m, n))

    vmem_limit = int(min(max(int(vmem_need(tm, tn) * 1.25), 32 << 20),
                         int(vmem_cap * 0.95)))

    out_padded = pl.pallas_call(
        _group_linear_kernel,
        out_shape=jax.ShapeDtypeStruct((m_pad, O), x.dtype),
        grid_spec=pltpu.PrefetchScalarGridSpec(
            num_scalar_prefetch=2,
            grid=(num_tiles, num_o_tiles),
            in_specs=[x_spec, w_spec],
            out_specs=o_spec,
        ),
        compiler_params=pltpu.CompilerParams(
            dimension_semantics=("parallel", "parallel"),
            vmem_limit_bytes=vmem_limit,
        ),
    )(tile_group, tile_valid, x_padded, w_t)

    # Gather each token's routed output row and drop the group padding.
    return out_padded[token_dest].reshape(N, S, O)


def init_weight(key, n_groups, out_features, in_features):
    # xavier_uniform_ per group slice of shape (out_features, in_features):
    # bound = sqrt(6 / (fan_in + fan_out))
    bound = (6.0 / (in_features + out_features)) ** 0.5
    return jax.random.uniform(
        key, (n_groups, out_features, in_features),
        dtype=jnp.float32, minval=-bound, maxval=bound,
    )


def _reference(x, group, weight):
    # Pure-JAX reference reproducing the torch einsum + gather semantics.
    full = jnp.einsum("nsi,goi->nsgo", x, weight)                 # (N, S, G, O)
    idx = group[:, :, None, None]                                  # (N, S, 1, 1)
    O = weight.shape[1]
    return jnp.take_along_axis(
        full, jnp.broadcast_to(idx, (*group.shape, 1, O)), axis=-2)[..., 0, :]


if __name__ == "__main__":
    key = jax.random.PRNGKey(0)
    k_x, k_w, k_g = jax.random.split(key, 3)

    N, S = 2, 8          # batch, seq
    I, O = 32, 32        # in_features, out_features
    G = 4                # n_groups

    x = jax.random.normal(k_x, (N, S, I), dtype=jnp.float32)
    weight = init_weight(k_w, G, O, I)
    group = jax.random.randint(k_g, (N, S), 0, G, dtype=jnp.int32)

    # tm=8 exercises multiple M tiles, per-group padding and trailing invalid tiles.
    out = jax.block_until_ready(group_linear(x, group, weight, tm=8, tn=O))
    ref = _reference(x, group, weight)
    assert out.shape == (N, S, O)
    assert jnp.allclose(out, ref, atol=1e-5, rtol=1e-5)

    # Second config: one group completely empty (exercises empty groups + skipped tiles).
    group2 = group % (G - 1)
    out2 = jax.block_until_ready(group_linear(x, group2, weight, tm=8, tn=O))
    ref2 = _reference(x, group2, weight)
    assert jnp.allclose(out2, ref2, atol=1e-5, rtol=1e-5)

    print("KERNEL_OK")
</pallas_src>

<mosaic_0001>
module attributes {stable_mosaic.version = 11 : i64} {
  func.func @_group_linear_kernel(%arg0: i32, %arg1: i32, %arg2: memref<5xi32, #tpu.memory_space<smem>>, %arg3: memref<5xi32, #tpu.memory_space<smem>>, %arg4: memref<8x32xf32, #tpu.memory_space<vmem>>, %arg5: memref<1x32x32xf32, #tpu.memory_space<vmem>>, %arg6: memref<8x32xf32, #tpu.memory_space<vmem>>) attributes {dimension_semantics = [#tpu.dimension_semantics<parallel>, #tpu.dimension_semantics<parallel>], iteration_bounds = array<i64: 5, 1>, scalar_prefetch = 2 : i64, scratch_operands = 0 : i64, tpu.core_type = #tpu.core_type<tc>, window_params = [{transform_indices = @transform_0, window_bounds = array<i64: 8, 32>}, {transform_indices = @transform_1, window_bounds = array<i64: 1, 32, 32>}, {transform_indices = @transform_2, window_bounds = array<i64: 8, 32>}]} {
    %0 = arith.index_cast %arg0 : i32 to index
    %1 = memref.load %arg3[%0] : memref<5xi32, #tpu.memory_space<smem>>
    %c1_i32 = arith.constant 1 : i32
    %2 = arith.cmpi eq, %1, %c1_i32 : i32
    %3 = arith.extui %2 : i1 to i32
    %c0_i32 = arith.constant 0 : i32
    %4 = arith.cmpi ne, %3, %c0_i32 : i32
    scf.if %4 {
      %c0 = arith.constant 0 : index
      %c0_2 = arith.constant 0 : index
      %10 = vector.load %arg4[%c0, %c0_2] : memref<8x32xf32, #tpu.memory_space<vmem>>, vector<8x32xf32>
      %c0_3 = arith.constant 0 : index
      %c0_4 = arith.constant 0 : index
      %c0_5 = arith.constant 0 : index
      %11 = vector.load %arg5[%c0_3, %c0_4, %c0_5] : memref<1x32x32xf32, #tpu.memory_space<vmem>>, vector<1x32x32xf32>
      %12 = vector.shape_cast %11 : vector<1x32x32xf32> to vector<32x32xf32>
      %cst = arith.constant dense<0.000000e+00> : vector<8x32xf32>
      %13 = tpu.matmul %10, %12, %cst {dimension_numbers = #tpu.dot_dimension_numbers<[1], [0], [0], [1], [0, 0, 1, 1], [], []>} : vector<8x32xf32>, vector<32x32xf32>, vector<8x32xf32> -> vector<8x32xf32>
      %c0_6 = arith.constant 0 : index
      %c0_7 = arith.constant 0 : index
      %14 = vector.load %arg6[%c0_6, %c0_7] : memref<8x32xf32, #tpu.memory_space<vmem>>, vector<8x32xf32>
      tpu.vector_store %arg6[%c0_6, %c0_7], %13 {strides = array<i32>} : memref<8x32xf32, #tpu.memory_space<vmem>>, vector<8x32xf32>,
    } else {
    }
    %5 = arith.index_cast %arg0 : i32 to index
    %6 = memref.load %arg3[%5] : memref<5xi32, #tpu.memory_space<smem>>
    %c0_i32_0 = arith.constant 0 : i32
    %7 = arith.cmpi eq, %6, %c0_i32_0 : i32
    %8 = arith.extui %7 : i1 to i32
    %c0_i32_1 = arith.constant 0 : i32
    %9 = arith.cmpi ne, %8, %c0_i32_1 : i32
    scf.if %9 {
      %cst = arith.constant 0.000000e+00 : f32
      %10 = vector.broadcast %cst : f32 to vector<8x32xf32>
      %c0 = arith.constant 0 : index
      %c0_2 = arith.constant 0 : index
      %11 = vector.load %arg6[%c0, %c0_2] : memref<8x32xf32, #tpu.memory_space<vmem>>, vector<8x32xf32>
      tpu.vector_store %arg6[%c0, %c0_2], %10 {strides = array<i32>} : memref<8x32xf32, #tpu.memory_space<vmem>>, vector<8x32xf32>,
    } else {
    }
    return
  }
  func.func @transform_0(%arg0: i32, %arg1: i32, %arg2: memref<5xi32, #tpu.memory_space<smem>>, %arg3: memref<5xi32, #tpu.memory_space<smem>>) -> (i32, i32) {
    %c0_i32 = arith.constant 0 : i32
    %c0_i32_0 = arith.constant 0 : i32
    return %arg0, %c0_i32 : i32, i32
  }
  func.func @transform_1(%arg0: i32, %arg1: i32, %arg2: memref<5xi32, #tpu.memory_space<smem>>, %arg3: memref<5xi32, #tpu.memory_space<smem>>) -> (i32, i32, i32) {
    %0 = arith.index_cast %arg0 : i32 to index
    %1 = memref.load %arg2[%0] : memref<5xi32, #tpu.memory_space<smem>>
    %c0_i32 = arith.constant 0 : i32
    %c0_i32_0 = arith.constant 0 : i32
    return %1, %c0_i32, %arg1 : i32, i32, i32
  }
  func.func @transform_2(%arg0: i32, %arg1: i32, %arg2: memref<5xi32, #tpu.memory_space<smem>>, %arg3: memref<5xi32, #tpu.memory_space<smem>>) -> (i32, i32) {
    %c0_i32 = arith.constant 0 : i32
    return %arg0, %arg1 : i32, i32
  }
}

</mosaic_0001>

<llo_original>
// kernel: tpu_custom_call.1
$region0: #{tpu_custom_call.1}
  #allocation0 [shape = 'u32[]', space=smem, size = 0x4, offset = 0x4, fixed_abs, tag = 'smem constant byte address 0x4 - core index']
  #allocation1 [shape = 'u32[144,128]{1,0:T(1,128)}', space=vmem, size = 0x12000, scoped, tag = 'internal scratch']
  #allocation2 [shape = 's32[1]{0}', space=sflag, size = 0x4, scoped, tag = 'scoped memory for tpu_custom_call.1']
  #allocation3 [shape = 'u8[512]{0}', space=smem, size = 0x200, scoped, tag = 'prefetched SMEM operand 0']
  #allocation4 [shape = 'u8[512]{0}', space=smem, size = 0x200, scoped, tag = 'prefetched SMEM operand 1']
  %s0 = inlined_call_operand.vmem [shape: s32[5], index: 0, kind: input, shape index: {}]
  %s1 = inlined_call_operand.vmem [shape: s32[5], index: 1, kind: input, shape index: {}]
  %s2 = inlined_call_operand.vmem [shape: f32[40,32], index: 2, kind: input, shape index: {}]
  %s3 = inlined_call_operand.hbm [shape: f32[4,32,32], index: 3, kind: input, shape index: {}]
  %s4 = inlined_call_operand.vmem [shape: f32[40,32], index: 4, kind: output, shape index: {}]
  %s5 = sld [smem:[#allocation0]]
  $region53: #{tpu_custom_call.1} parent=0
    _
  %s7 = ssub.s32 1, %s5
  %s8 = scalar_select 0, %s7, %s5
  %s9 = sshll.u32 %s0, 4
  %s10 = int_to_ptr.vmem [resolvable:$true] %s9
  %12 = dma.vmem_to_smem %s10, 16, [#allocation3], [#allocation2]
  %s13 = sshll.u32 %s1, 4
  %s14 = int_to_ptr.vmem [resolvable:$true] %s13
  %16 = dma.vmem_to_smem %s14, 16, [#allocation4], [#allocation2]
  %17 = dma.done [#allocation2], 32
  %18 = sfence
  $region1: #{tpu_custom_call.1} parent=0
    #allocation5 [shape = 'u8[32768]{0}', space=vmem, size = 0x8000, scoped, tag = 'input window, operand 3']
    #allocation6 [shape = 's32[2]{0}', space=sflag, size = 0x8, scoped, tag = 'scoped memory for tpu_custom_call.1']
    %19 = vsyncpa [#allocation6], 0
    %s20 = scalar_lea.sflag [#allocation6], 1
    %21 = vsyncpa %s20, 0
    loop: start=0, step=1, limit=7
    $region2: #{tpu_custom_call.1} parent=1 // loop_pre_header
      _
    $region3: #{tpu_custom_call.1} parent=1 // loop_header
      %s23 = sphi 0, %s27
      %p24 = scmp.ge.s32.totalorder %s23, 7
      %s30 = sphi 0, %s42
      %s31 = sphi 0, %s38
      %s32 = sphi 0, %s30
      %s33 = sphi 0, %s31
      %s34 = sphi 0, %s32
      %s35 = sphi 0, %s33
      %s45 = sphi 0, %s47
      %s48 = sphi 0, %s45
      %s49 = sphi 0, %s48
      %s65 = sphi 0, %s49
      %s75 = sphi 0, %s77
      %s78 = sphi 0, %s75
      %s79 = sphi 0, %s78
      %s95 = sphi 0, %s79
      %s103 = sphi 0, %s105
      %s106 = sphi 0, %s103
      %s107 = sphi 0, %s106
      %s123 = sphi 0, %s107
    $region4: #{tpu_custom_call.1} parent=1 // loop_header_branch
      %26 = sbr.rel (%p24) target = $region8
    $region5: #{tpu_custom_call.1} parent=1 // loop_body
      %s28 = ssub.s32 %s23, 1
      %s29 = ssub.s32 %s23, 2
      %s36 = sadd.s32 1, %s31
      %p37 = scmp.ge.s32.totalorder %s36, 1
      %s38 = scalar_select %p37, 0, %s36
      %s39 = sadd.s32 1, %s30
      %s40 = scalar_select %p37, %s39, %s30
      %p41 = scmp.ge.s32.totalorder %s40, 5
      %s42 = scalar_select %p41, 0, %s40
      %s43 = ssub.s32 %s30, %s42
      %p44 = scmp.eq.s32.totalorder %s43, 0
      %s46 = sadd.s32 %s45, 1
      %s47 = scalar_select %p44, %s45, %s46
      %p50 = pneg %p44
      %p51 = scmp.eq.s32.totalorder %s23, 4
      %p52 = por %p50, %p51
      %p53 = scmp.ne.s32.totalorder %s45, %s48
      %p54 = scmp.eq.s32.totalorder %s23, 0
      %p55 = por %p53, %p54
      %p56 = scmp.ne.s32.totalorder %s45, %s48
      %p57 = scmp.eq.s32.totalorder %s28, 4
      %p58 = por %p56, %p57
      %p59 = scmp.ne.s32.totalorder %s48, %s49
      %p60 = scmp.eq.s32.totalorder %s28, 0
      %p61 = por %p59, %p60
      %p62 = scmp.ne.s32.totalorder %s48, %s49
      %p63 = scmp.eq.s32.totalorder %s29, 4
      %p64 = por %p62, %p63
      %p66 = scmp.ne.s32.totalorder %s49, %s65
      %p67 = scmp.eq.s32.totalorder %s29, 0
      %p68 = por %p66, %p67
      %s69 = sld [smem:[#allocation3 + %s30]]
      %s70 = sld [smem:[#allocation3 + %s42]]
      %s71 = ssub.s32 %s69, %s70
      %s72 = ssub.s32 %s31, %s38
      %s73 = sor.u32 %s71, %s72
      %p74 = scmp.eq.s32.totalorder %s73, 0
      %s76 = sadd.s32 %s75, 1
      %s77 = scalar_select %p74, %s75, %s76
      %p80 = pneg %p74
      %p81 = scmp.eq.s32.totalorder %s23, 4
      %p82 = por %p80, %p81
      %p83 = scmp.ne.s32.totalorder %s75, %s78
      %p84 = scmp.eq.s32.totalorder %s23, 0
      %p85 = por %p83, %p84
      %p86 = scmp.ne.s32.totalorder %s75, %s78
      %p87 = scmp.eq.s32.totalorder %s28, 4
      %p88 = por %p86, %p87
      %p89 = scmp.ne.s32.totalorder %s78, %s79
      %p90 = scmp.eq.s32.totalorder %s28, 0
      %p91 = por %p89, %p90
      %p92 = scmp.ne.s32.totalorder %s78, %s79
      %p93 = scmp.eq.s32.totalorder %s29, 4
      %p94 = por %p92, %p93
      %p96 = scmp.ne.s32.totalorder %s79, %s95
      %p97 = scmp.eq.s32.totalorder %s29, 0
      %p98 = por %p96, %p97
      %s99 = ssub.s32 %s30, %s42
      %s100 = ssub.s32 %s31, %s38
      %s101 = sor.u32 %s99, %s100
      %p102 = scmp.eq.s32.totalorder %s101, 0
      %s104 = sadd.s32 %s103, 1
      %s105 = scalar_select %p102, %s103, %s104
      %p108 = pneg %p102
      %p109 = scmp.eq.s32.totalorder %s23, 4
      %p110 = por %p108, %p109
      %p111 = scmp.ne.s32.totalorder %s103, %s106
      %p112 = scmp.eq.s32.totalorder %s23, 0
      %p113 = por %p111, %p112
      %p114 = scmp.ne.s32.totalorder %s103, %s106
      %p115 = scmp.eq.s32.totalorder %s28, 4
      %p116 = por %p114, %p115
      %p117 = scmp.ne.s32.totalorder %s106, %s107
      %p118 = scmp.eq.s32.totalorder %s28, 0
      %p119 = por %p117, %p118
      %p120 = scmp.ne.s32.totalorder %s106, %s107
      %p121 = scmp.eq.s32.totalorder %s29, 4
      %p122 = por %p120, %p121
      %p124 = scmp.ne.s32.totalorder %s107, %s123
      %p125 = scmp.eq.s32.totalorder %s29, 0
      %p126 = por %p124, %p125
      %p127 = scmp.le.s32.totalorder 1, %s23
      %p128 = scmp.lt.s32.totalorder %s23, 6
      %p129 = pnand %p127, %p128
      %p130 = pneg %p129
      // Predicated region
      $region9: #{tpu_custom_call.1} parent=5 // pred_check
        _
      $region10: #{tpu_custom_call.1} parent=5 // pred_check_branch
        %132 = sbr.rel (%p129) target = $region12
      $region11: #{tpu_custom_call.1} parent=5 // pred_region
        %s133 = ssub.s32 %s23, 1
      $region12: #{tpu_custom_call.1} parent=5 // pred_fallthru
        _
      %p134 = scmp.lt.s32.totalorder %s23, 5
      // Predicated region
      $region13: #{tpu_custom_call.1} parent=5 // pred_check
        %p135 = pneg %p134
      $region14: #{tpu_custom_call.1} parent=5 // pred_check_branch
        %137 = sbr.rel (%p135) target = $region16
      $region15: #{tpu_custom_call.1} parent=5 // pred_region
        // Predicated region
        $region17: #{tpu_custom_call.1} parent=15 // pred_check
          %p138 = pneg %p55
        $region18: #{tpu_custom_call.1} parent=15 // pred_check_branch
          %140 = sbr.rel (%p138) target = $region20
        $region19: #{tpu_custom_call.1} parent=15 // pred_region
          %p141 = scmp.lt.s32.totalorder %s30, 4
          %s142 = scalar_select %p141, %s30, 4
          %s143 = smul.addr %s142, 8
          %s144 = scalar_lea.vmem %s2, %s143
        $region20: #{tpu_custom_call.1} parent=15 // pred_fallthru
          _
        // Predicated region
        $region21: #{tpu_custom_call.1} parent=15 // pred_check
          %p145 = pneg %p85
        $region22: #{tpu_custom_call.1} parent=15 // pred_check_branch
          %147 = sbr.rel (%p145) target = $region24
        $region23: #{tpu_custom_call.1} parent=15 // pred_region
          %s148 = sand.u32 %s75, 1
          %s149 = scalar_lea.sflag [#allocation6], %s148
          %s150 = sand.u32 %s75, 1
          %s151 = smul.addr %s150, 32
          %s152 = scalar_lea.vmem [#allocation5], %s151
          %s153 = sld [smem:[#allocation3 + %s30]]
          %s155 = ssub.s32 512, 512
          %156 = vsyncadd %s149, %s155
          %s157 = smul.addr %s153, 4
          %s158 = sadd.s32 %s31, %s157
          %s159 = smul.addr %s158, 128
          %s160 = scalar_lea.hbm %s3, %s159
          %s161 = sshll.u32 %s152, 4
          %s162 = int_to_ptr.vmem [resolvable:$true] %s161
          %167 = dma.hbm_to_vmem [thread:$0]  %s160, 512, %s162, %s149, 128, 128, 8
        $region24: #{tpu_custom_call.1} parent=15 // pred_fallthru
          _
      $region16: #{tpu_custom_call.1} parent=5 // pred_fallthru
        _
      %p168 = scmp.le.s32.totalorder 1, %s23
      %p169 = scmp.lt.s32.totalorder %s23, 6
      %p170 = pnand %p168, %p169
      %p171 = pneg %p170
      // Predicated region
      $region25: #{tpu_custom_call.1} parent=5 // pred_check
        _
      $region26: #{tpu_custom_call.1} parent=5 // pred_check_branch
        %173 = sbr.rel (%p170) target = $region28
      $region27: #{tpu_custom_call.1} parent=5 // pred_region
        %s174 = ssub.s32 %s23, 1
        %s175 = sand.u32 %s78, 1
        %s176 = scalar_lea.sflag [#allocation6], %s175
        %s177 = sand.u32 %s78, 1
        %s178 = smul.addr %s177, 32
        %s179 = scalar_lea.vmem [#allocation5], %s178
        // Predicated region
        $region29: #{tpu_custom_call.1} parent=27 // pred_check
          %p180 = pneg %p91
        $region30: #{tpu_custom_call.1} parent=27 // pred_check_branch
          %182 = sbr.rel (%p180) target = $region32
        $region31: #{tpu_custom_call.1} parent=27 // pred_region
          %183 = dma.done %s176, 512
        $region32: #{tpu_custom_call.1} parent=27 // pred_fallthru
          _
        %p184 = scmp.lt.s32.totalorder %s32, 4
        %s185 = scalar_select %p184, %s32, 4
        %s186 = smul.addr %s185, 8
        %s187 = scalar_lea.vmem %s2, %s186
        %p188 = pneg %p61
        %p189 = pneg %p58
        %s190 = sand.u32 %s78, 1
        %s191 = scalar_lea.sflag [#allocation6], %s190
        %s192 = sand.u32 %s78, 1
        %s193 = smul.addr %s192, 32
        %s194 = scalar_lea.vmem [#allocation5], %s193
        %p195 = pneg %p91
        %p196 = pneg %p88
        %p197 = pneg %p119
        %p198 = pneg %p116
        %p199 = scmp.lt.s32.totalorder %s32, 4
        %s200 = scalar_select %p199, %s32, 4
        %p201 = scmp.lt.s32.totalorder %s33, 0
        %s202 = scalar_select %p201, %s33, 0
        %s203 = sadd.s32 %s202, %s200
        %s204 = smul.addr %s203, 8
        %s205 = scalar_lea.vmem %s4, %s204
        %p206 = scmp.lt.s32.totalorder %s32, 4
        %s207 = scalar_select %p206, %s32, 4
        %s208 = smul.addr %s207, 8
        %s209 = scalar_lea.vmem %s2, %s208
        %s210 = sld [smem:[#allocation3 + %s32]]
        %p211 = scmp.lt.s32.totalorder %s32, 4
        %s212 = scalar_select %p211, %s32, 4
        %p213 = scmp.lt.s32.totalorder %s33, 0
        %s214 = scalar_select %p213, %s33, 0
        %s215 = sadd.s32 %s214, %s212
        %s216 = smul.addr %s215, 8
        %s217 = scalar_lea.vmem %s4, %s216
        %s218 = sld [smem:[#allocation4 + %s32]]
        %p219 = scmp.eq.s32.totalorder %s218, 1
        // Predicated region
        $region33: #{tpu_custom_call.1} parent=27 // pred_check
          %p220 = pneg %p219
        $region34: #{tpu_custom_call.1} parent=27 // pred_check_branch
          %222 = sbr.rel (%p220) target = $region36
        $region35: #{tpu_custom_call.1} parent=27 // pred_region
          %v223 = vld [vmem:[%s209] sm:$0xff]
          %v224 = vld [vmem:[%s179] sm:$0xff]
          %v225 = vld [vmem:[%s179 + $0x8] sm:$0xff]
          %v226 = vld [vmem:[%s179 + $0x10] sm:$0xff]
          %v227 = vld [vmem:[%s179 + $0x18] sm:$0xff]
          %vm228 = vcmask 261120
          %v230 = vsel %vm228, %v223, 0
          %232 = vmatprep.subr.mxu0 0.0
          %233 = vmatpush1.msra.mxu0 %v224
          %234 = vmatprep.subr.mxu0 0.0
          %235 = vmatpush1.msra.mxu0 %v225
          %236 = vmatprep.subr.mxu0 0.0
          %237 = vmatpush1.msra.mxu0 %v226
          %238 = vmatprep.subr.mxu0 0.0
          %239 = vmatpush1.msra.mxu0 %v227
          %240 = vmatprep.subr.mxu0 0.0
          %241 = vmatpush1.msra.mxu0 0.0
          %242 = vmatprep.subr.mxu0 0.0
          %243 = vmatpush1.msra.mxu0 0.0
          %244 = vmatprep.subr.mxu0 0.0
          %245 = vmatpush1.msra.mxu0 0.0
          %246 = vmatprep.subr.mxu0 0.0
          %247 = vmatpush1.msra.mxu0 0.0
          %248 = vmatprep.subr.mxu0 0.0
          %249 = vmatpush1.msra.mxu0 0.0
          %250 = vmatprep.subr.mxu0 0.0
          %251 = vmatpush1.msra.mxu0 0.0
          %252 = vmatprep.subr.mxu0 0.0
          %253 = vmatpush1.msra.mxu0 0.0
          %254 = vmatprep.subr.mxu0 0.0
          %255 = vmatpush1.msra.mxu0 0.0
          %256 = vmatprep.subr.mxu0 0.0
          %257 = vmatpush1.msra.mxu0 0.0
          %258 = vmatprep.subr.mxu0 0.0
          %259 = vmatpush1.msra.mxu0 0.0
          %260 = vmatprep.subr.mxu0 0.0
          %261 = vmatpush1.msra.mxu0 0.0
          %262 = vmatprep.subr.mxu0 0.0
          %263 = vmatpush1.msra.mxu0 0.0
          %264 = vmatprep.subr.mxu0 0.0
          %265 = vmatpush1.msra.mxu0 0.0
          %266 = vmatprep.subr.mxu0 0.0
          %267 = vmatpush1.msra.mxu0 0.0
          %268 = vmatprep.subr.mxu0 0.0
          %269 = vmatpush1.msra.mxu0 0.0
          %270 = vmatprep.subr.mxu0 0.0
          %271 = vmatpush1.msra.mxu0 0.0
          %272 = vmatprep.subr.mxu0 0.0
          %273 = vmatpush1.msra.mxu0 0.0
          %274 = vmatprep.subr.mxu0 0.0
          %275 = vmatpush1.msra.mxu0 0.0
          %276 = vmatprep.subr.mxu0 0.0
          %277 = vmatpush1.msra.mxu0 0.0
          %278 = vmatprep.subr.mxu0 0.0
          %279 = vmatpush1.msra.mxu0 0.0
          %280 = vmatprep.subr.mxu0 0.0
          %281 = vmatpush1.msra.mxu0 0.0
          %282 = vmatprep.subr.mxu0 0.0
          %283 = vmatpush1.msra.mxu0 0.0
          %284 = vmatprep.subr.mxu0 0.0
          %285 = vmatpush1.msra.mxu0 0.0
          %286 = vmatprep.subr.mxu0 0.0
          %287 = vmatpush1.msra.mxu0 0.0
          %288 = vmatprep.subr.mxu0 0.0
          %289 = vmatpush1.msra.mxu0 0.0
          %290 = vmatprep.subr.mxu0 0.0
          %291 = vmatpush1.msra.mxu0 0.0
          %292 = vmatprep.subr.mxu0 0.0
          %293 = vmatpush1.msra.mxu0 0.0
          %294 = vmatprep.subr.mxu0 0.0
          %295 = vmatpush1.msra.mxu0 0.0
          %296 = vmatprep.mubr.f32.mxu0 0.0
          %297 = vmatmul.mubr.f32.gmra.mrb[0].mxu0 %v230
          %v298 = vpop.f32.mrb[0].mxu0
          %v299 = vadd.f32 0.0, %v298
          %v300 = vpop.f32.mrb[0].mxu0
          %301 = vdwg.mxu0
          %302 = vst.msk [vmem:[%s217] sm:$0xff] %vm228, %v299
        $region36: #{tpu_custom_call.1} parent=27 // pred_fallthru
          _
        %s303 = sld [smem:[#allocation4 + %s32]]
        %p304 = scmp.eq.s32.totalorder %s303, 0
        // Predicated region
        $region37: #{tpu_custom_call.1} parent=27 // pred_check
          %p305 = pneg %p304
        $region38: #{tpu_custom_call.1} parent=27 // pred_check_branch
          %307 = sbr.rel (%p305) target = $region40
        $region39: #{tpu_custom_call.1} parent=27 // pred_region
          %vm308 = vcmask 261120
          %309 = vst.msk [vmem:[%s217] sm:$0xff] %vm308, 0.0
        $region40: #{tpu_custom_call.1} parent=27 // pred_fallthru
          _
        %p310 = scmp.lt.s32.totalorder %s32, 4
        %s311 = scalar_select %p310, %s32, 4
        %p312 = scmp.lt.s32.totalorder %s33, 0
        %s313 = scalar_select %p312, %s33, 0
        %s314 = sadd.s32 %s313, %s311
        %s315 = smul.addr %s314, 8
        %s316 = scalar_lea.vmem %s4, %s315
        // Predicated region
        $region41: #{tpu_custom_call.1} parent=27 // pred_check
          %p317 = pneg %p116
        $region42: #{tpu_custom_call.1} parent=27 // pred_check_branch
          %319 = sbr.rel (%p317) target = $region44
        $region43: #{tpu_custom_call.1} parent=27 // pred_region
          _
        $region44: #{tpu_custom_call.1} parent=27 // pred_fallthru
          _
      $region28: #{tpu_custom_call.1} parent=5 // pred_fallthru
        _
      %p320 = scmp.le.s32.totalorder 2, %s23
      // Predicated region
      $region45: #{tpu_custom_call.1} parent=5 // pred_check
        %p321 = pneg %p320
      $region46: #{tpu_custom_call.1} parent=5 // pred_check_branch
        %323 = sbr.rel (%p321) target = $region48
      $region47: #{tpu_custom_call.1} parent=5 // pred_region
        %s324 = ssub.s32 %s23, 2
        // Predicated region
        $region49: #{tpu_custom_call.1} parent=47 // pred_check
          %p325 = pneg %p122
        $region50: #{tpu_custom_call.1} parent=47 // pred_check_branch
          %327 = sbr.rel (%p325) target = $region52
        $region51: #{tpu_custom_call.1} parent=47 // pred_region
          %p328 = scmp.lt.s32.totalorder %s34, 4
          %s329 = scalar_select %p328, %s34, 4
          %p330 = scmp.lt.s32.totalorder %s35, 0
          %s331 = scalar_select %p330, %s35, 0
          %s332 = sadd.s32 %s331, %s329
          %s333 = smul.addr %s332, 8
          %s334 = scalar_lea.vmem %s4, %s333
        $region52: #{tpu_custom_call.1} parent=47 // pred_fallthru
          _
      $region48: #{tpu_custom_call.1} parent=5 // pred_fallthru
        _
    $region6: #{tpu_custom_call.1} parent=1 // loop_footer
      %s27 = sadd.s32 1, %s23
    $region7: #{tpu_custom_call.1} parent=1 // loop_footer_branch
      %22 = sbr.rel target = $region3
    $region8: #{tpu_custom_call.1} parent=1 // loop_exit
      _
    %335 = vsyncpa [#allocation6], 1
    %s336 = scalar_lea.sflag [#allocation6], 1
    %337 = vsyncpa %s336, 1

</llo_original>
